<compile_context>
chip_gen: v7x
topology: tpu7x:2x2x1
jax: 0.10.0
libtpu: 0.0.40
codegen_flags: <defaults>
</compile_context>

<pallas_src>
import functools

import jax
import jax.numpy as jnp
from jax import lax
from jax.experimental import pallas as pl
from jax.experimental.pallas import tpu as pltpu


def _lsce_partial_kernel(preds_ref, target_ref, out_ref, *,
                         n_total: int, mask_tail: bool, use_bf16_exp: bool):
    """Per-tile partial sums.

    preds_ref : (T, C)     native dtype (cast to f32 in-kernel)
    target_ref: (T, 1)     int32
    out_ref   : (1, 8, 128) f32 ; [0,0,0] = sum_i [-sum_c log_preds],
                                  [0,1,0] = sum_i [-log_preds[i, t_i]]
    """
    x = preds_ref[...].astype(jnp.float32)                       # (T, C)
    t_rows, n_classes = x.shape
    tgt = target_ref[...]                                        # (T, 1) int32

    # Row-wise log-partition z = m + log(sum(exp(x - m))).
    m = jnp.max(x, axis=-1, keepdims=True)                       # (T, 1)
    xm = x - m
    if use_bf16_exp:
        # Packed bf16 EUP path (~2x transcendental throughput; v6e/v7x only,
        # validate tolerance before enabling).
        e = jnp.exp(xm.astype(jnp.bfloat16)).astype(jnp.float32)
    else:
        e = jnp.exp(xm)
    z = m + jnp.log(jnp.sum(e, axis=-1, keepdims=True))          # (T, 1)

    # Keep both remaining reductions over x adjacent so they consume the same
    # loaded vregs (one traversal of the tile).
    sum_x = jnp.sum(x, axis=-1, keepdims=True)                   # (T, 1)
    col = lax.broadcasted_iota(jnp.int32, x.shape, 1)
    x_t = jnp.sum(jnp.where(col == tgt, x, 0.0), axis=-1, keepdims=True)

    # Algebraic rewrites (log_preds never materialized):
    #   -sum_c log_softmax(x)  = C*z - sum_c x
    #   -log_softmax(x)[i,t_i] = z - x[i, t_i]
    neg_sum_lp = n_classes * z - sum_x                           # (T, 1)
    nll_row = z - x_t                                            # (T, 1)

    if mask_tail:
        # Only the (T,1) partials need masking: garbage in rows past n_total
        # stays confined to those rows and is removed by this select.
        i = pl.program_id(0)
        row_global = i * t_rows + lax.broadcasted_iota(jnp.int32, (t_rows, 1), 0)
        valid = row_global < n_total
        neg_sum_lp = jnp.where(valid, neg_sum_lp, 0.0)
        nll_row = jnp.where(valid, nll_row, 0.0)

    loss_partial = jnp.sum(neg_sum_lp)
    nll_partial = jnp.sum(nll_row)

    # Lane-dense (8,128) output slab: [0,0]=loss partial, [1,0]=nll partial.
    rows8 = lax.broadcasted_iota(jnp.int32, (8, 128), 0)
    block = jnp.where(rows8 == 0, loss_partial,
                      jnp.where(rows8 == 1, nll_partial, 0.0))
    out_ref[...] = block[None]


def _pick_tile(n, c, itemsize, row_align, tile_n):
    """Byte-budget tile sizing (generation-aware). Returns (rows, vmem_limit)."""
    try:
        vmem_cap = int(pltpu.get_tpu_info().vmem_capacity_bytes)
    except Exception:
        vmem_cap = 64 * 1024 * 1024            # conservative fallback (fits all gens)
    # ~half of physical VMEM for this kernel, capped at 64 MiB
    # (v5e/v6e: 64 of 128 MiB; v7x: 32 of 64 MiB).
    base_limit = min(64 * 1024 * 1024, max(32 * 1024 * 1024, vmem_cap // 2))

    # Per-row VMEM footprint:
    #   2x double-buffered native preds row              : 2 * c * itemsize
    #   2x double-buffered (row,1) int32 target row,
    #      lane-padded to 128 lanes in VMEM              : 2 * 128 * 4
    #   ~4 live f32 (row, C) temporaries in the body     : 4 * c * 4
    per_row = 2 * c * itemsize + 2 * 128 * 4 + 4 * c * 4

    if tile_n is None:
        rows = int(0.6 * base_limit) // per_row
        # Keep >= ~8 grid steps so the "parallel" batch axis can feed both
        # v7x TensorCores; negligible overhead on single-TC generations.
        rows_for_8 = pl.cdiv(n, 8)
        rows_for_8 = ((rows_for_8 + row_align - 1) // row_align) * row_align
        rows = min(rows, max(row_align, rows_for_8))
    else:
        rows = tile_n

    rows = max(row_align, (rows // row_align) * row_align)
    if n <= rows:
        rows = n                                # full-extent block is always legal

    est = rows * per_row + (2 << 20)            # + slack for output slabs / misc
    vmem_limit = max(base_limit, est)
    if vmem_cap > (8 << 20):
        vmem_limit = min(vmem_limit, vmem_cap)
    return rows, int(vmem_limit)


def label_smoothing_cross_entropy(preds, target, *, epsilon: float = 0.1,
                                  tile_n: int | None = None,
                                  use_bf16_exp: bool = False):
    """preds: (N, C) float array (any float dtype), target: (N,) int labels -> scalar f32.

    Implements reduction='mean' (the module default).
    # TODO(synk): reduction='sum' / 'none' variants are not implemented.
    """
    n, c = preds.shape
    target_2d = target.astype(jnp.int32).reshape(n, 1)

    # Sublane packing: 8 rows for 32-bit dtypes, 16 for 16-bit dtypes.
    row_align = 8 if preds.dtype.itemsize >= 4 else 16
    rows, vmem_limit = _pick_tile(n, c, preds.dtype.itemsize, row_align, tile_n)

    num_tiles = pl.cdiv(n, rows)
    mask_tail = (n % rows) != 0
    kernel = functools.partial(_lsce_partial_kernel, n_total=n,
                               mask_tail=mask_tail, use_bf16_exp=use_bf16_exp)

    partials = pl.pallas_call(
        kernel,
        out_shape=jax.ShapeDtypeStruct((num_tiles, 8, 128), jnp.float32),
        grid_spec=pltpu.PrefetchScalarGridSpec(
            num_scalar_prefetch=0,
            grid=(num_tiles,),
            in_specs=[
                pl.BlockSpec((rows, c), lambda i: (i, 0)),
                # TODO(synk): for C < 128, lane-pack preds ((N,C)->(N/k,k*C)) and
                # feed targets lane-dense; the (rows,1) block below is lane-padded
                # in VMEM, which is why it is counted in the tile byte budget.
                pl.BlockSpec((rows, 1), lambda i: (i, 0)),
            ],
            out_specs=pl.BlockSpec((1, 8, 128), lambda i: (i, 0, 0)),
        ),
        compiler_params=pltpu.CompilerParams(
            dimension_semantics=("parallel",),
            vmem_limit_bytes=vmem_limit,
        ),
    )(preds, target_2d)

    # Tiny final reduction + epsilon mix in the wrapper (noise vs. kernel cost).
    loss = jnp.sum(partials[:, 0, 0]) / n
    nll = jnp.sum(partials[:, 1, 0]) / n
    eps = jnp.float32(epsilon)
    return eps * (loss / c) + (1.0 - eps) * nll


def _reference(preds, target, epsilon=0.1):
    log_preds = jax.nn.log_softmax(preds.astype(jnp.float32), axis=-1)
    loss = jnp.mean(-jnp.sum(log_preds, axis=-1))
    nll = jnp.mean(-jnp.take_along_axis(
        log_preds, target.astype(jnp.int32)[:, None], axis=-1)[:, 0])
    c = preds.shape[-1]
    return epsilon * (loss / c) + (1 - epsilon) * nll


if __name__ == "__main__":
    key = jax.random.PRNGKey(0)
    k1, k2, k3, k4, k5, k6 = jax.random.split(key, 6)

    # Case 1: small canonical shape, single tile, exact block fit.
    N, C = 8, 32
    preds = jax.random.normal(k1, (N, C), dtype=jnp.float32)
    target = jax.random.randint(k2, (N,), 0, C, dtype=jnp.int32)
    out = jax.block_until_ready(label_smoothing_cross_entropy(preds, target, epsilon=0.1))
    ref = _reference(preds, target, epsilon=0.1)
    assert jnp.allclose(out, ref, atol=1e-5, rtol=1e-5), (out, ref)

    # Case 2: explicit tile smaller than batch -> multi-tile grid + ragged tail mask.
    N2, C2 = 40, 32
    preds2 = jax.random.normal(k3, (N2, C2), dtype=jnp.float32)
    target2 = jax.random.randint(k4, (N2,), 0, C2, dtype=jnp.int32)
    out2 = jax.block_until_ready(
        label_smoothing_cross_entropy(preds2, target2, epsilon=0.1, tile_n=16))
    ref2 = _reference(preds2, target2, epsilon=0.1)
    assert jnp.allclose(out2, ref2, atol=1e-5, rtol=1e-5), (out2, ref2)

    # Case 3: bf16 input, auto tile sizing, odd C, ragged tail (exercises the
    # >=8-tile grid split and the native-dtype in-kernel f32 cast).
    N3, C3 = 300, 257
    preds3 = jax.random.normal(k5, (N3, C3), dtype=jnp.bfloat16)
    target3 = jax.random.randint(k6, (N3,), 0, C3, dtype=jnp.int32)
    out3 = jax.block_until_ready(label_smoothing_cross_entropy(preds3, target3, epsilon=0.1))
    ref3 = _reference(preds3, target3, epsilon=0.1)
    assert jnp.allclose(out3, ref3, atol=1e-3, rtol=1e-4), (out3, ref3)

    print("KERNEL_OK")
</pallas_src>

<mosaic_0001>
module attributes {stable_mosaic.version = 11 : i64} {
  func.func @_lsce_partial_kernel(%arg0: i32, %arg1: memref<8x32xf32, #tpu.memory_space<vmem>>, %arg2: memref<8x1xi32, #tpu.memory_space<vmem>>, %arg3: memref<1x8x128xf32, #tpu.memory_space<vmem>>) attributes {dimension_semantics = [#tpu.dimension_semantics<parallel>], iteration_bounds = array<i64: 1>, scalar_prefetch = 0 : i64, scratch_operands = 0 : i64, tpu.core_type = #tpu.core_type<tc>, window_params = [{transform_indices = @transform_0, window_bounds = array<i64: 8, 32>}, {transform_indices = @transform_1, window_bounds = array<i64: 8, 1>}, {transform_indices = @transform_2, window_bounds = array<i64: 1, 8, 128>}]} {
    %c0 = arith.constant 0 : index
    %c0_0 = arith.constant 0 : index
    %0 = vector.load %arg1[%c0, %c0_0] : memref<8x32xf32, #tpu.memory_space<vmem>>, vector<8x32xf32>
    %c0_1 = arith.constant 0 : index
    %c0_2 = arith.constant 0 : index
    %1 = vector.load %arg2[%c0_1, %c0_2] : memref<8x1xi32, #tpu.memory_space<vmem>>, vector<8x1xi32>
    %cst = arith.constant dense<0xFF800000> : vector<8xf32>
    %2 = vector.multi_reduction <maximumf>, %0, %cst [1] : vector<8x32xf32> to vector<8xf32>
    %3 = vector.shape_cast %2 : vector<8xf32> to vector<8x1xf32>
    %4 = vector.broadcast %3 : vector<8x1xf32> to vector<8x32xf32>
    %5 = arith.subf %0, %4 : vector<8x32xf32>
    %6 = math.exp %5 : vector<8x32xf32>
    %cst_3 = arith.constant dense<0.000000e+00> : vector<8xf32>
    %7 = vector.multi_reduction <add>, %6, %cst_3 [1] : vector<8x32xf32> to vector<8xf32>
    %8 = vector.shape_cast %7 : vector<8xf32> to vector<8x1xf32>
    %9 = math.log %8 : vector<8x1xf32>
    %10 = arith.addf %3, %9 : vector<8x1xf32>
    %cst_4 = arith.constant dense<0.000000e+00> : vector<8xf32>
    %11 = vector.multi_reduction <add>, %0, %cst_4 [1] : vector<8x32xf32> to vector<8xf32>
    %12 = vector.shape_cast %11 : vector<8xf32> to vector<8x1xf32>
    %13 = tpu.iota {dimensions = array<i32: 1>} : vector<8x32xi32>
    %14 = vector.broadcast %1 : vector<8x1xi32> to vector<8x32xi32>
    %15 = arith.cmpi eq, %13, %14 : vector<8x32xi32>
    %cst_5 = arith.constant 0.000000e+00 : f32
    %16 = vector.broadcast %cst_5 : f32 to vector<8x32xf32>
    %17 = arith.select %15, %0, %16 : vector<8x32xi1>, vector<8x32xf32>
    %cst_6 = arith.constant dense<0.000000e+00> : vector<8xf32>
    %18 = vector.multi_reduction <add>, %17, %cst_6 [1] : vector<8x32xf32> to vector<8xf32>
    %19 = vector.shape_cast %18 : vector<8xf32> to vector<8x1xf32>
    %cst_7 = arith.constant 3.200000e+01 : f32
    %20 = vector.broadcast %cst_7 : f32 to vector<8x1xf32>
    %21 = arith.mulf %20, %10 : vector<8x1xf32>
    %22 = arith.subf %21, %12 : vector<8x1xf32>
    %23 = arith.subf %10, %19 : vector<8x1xf32>
    %24 = vector.shape_cast %22 : vector<8x1xf32> to vector<1x8x1xf32>
    %cst_8 = arith.constant dense<0.000000e+00> : vector<1xf32>
    %25 = vector.multi_reduction <add>, %24, %cst_8 [1, 2] : vector<1x8x1xf32> to vector<1xf32>
    %26 = vector.shape_cast %25 : vector<1xf32> to vector<1x1x1xf32>
    %27 = vector.extract %26[0, 0, 0] : f32 from vector<1x1x1xf32>
    %28 = vector.shape_cast %23 : vector<8x1xf32> to vector<1x8x1xf32>
    %cst_9 = arith.constant dense<0.000000e+00> : vector<1xf32>
    %29 = vector.multi_reduction <add>, %28, %cst_9 [1, 2] : vector<1x8x1xf32> to vector<1xf32>
    %30 = vector.shape_cast %29 : vector<1xf32> to vector<1x1x1xf32>
    %31 = vector.extract %30[0, 0, 0] : f32 from vector<1x1x1xf32>
    %32 = tpu.iota {dimensions = array<i32: 0>} : vector<8x128xi32>
    %c0_i32 = arith.constant 0 : i32
    %33 = vector.broadcast %c0_i32 : i32 to vector<8x128xi32>
    %34 = arith.cmpi eq, %32, %33 : vector<8x128xi32>
    %c1_i32 = arith.constant 1 : i32
    %35 = vector.broadcast %c1_i32 : i32 to vector<8x128xi32>
    %36 = arith.cmpi eq, %32, %35 : vector<8x128xi32>
    %cst_10 = arith.constant 0.000000e+00 : f32
    %37 = vector.broadcast %31 : f32 to vector<8x128xf32>
    %38 = vector.broadcast %cst_10 : f32 to vector<8x128xf32>
    %39 = arith.select %36, %37, %38 : vector<8x128xi1>, vector<8x128xf32>
    %40 = vector.broadcast %27 : f32 to vector<8x128xf32>
    %41 = arith.select %34, %40, %39 : vector<8x128xi1>, vector<8x128xf32>
    %42 = vector.shape_cast %41 : vector<8x128xf32> to vector<1x8x128xf32>
    %c0_11 = arith.constant 0 : index
    %c0_12 = arith.constant 0 : index
    %c0_13 = arith.constant 0 : index
    %43 = vector.load %arg3[%c0_11, %c0_12, %c0_13] : memref<1x8x128xf32, #tpu.memory_space<vmem>>, vector<1x8x128xf32>
    tpu.vector_store %arg3[%c0_11, %c0_12, %c0_13], %42 {strides = array<i32>} : memref<1x8x128xf32, #tpu.memory_space<vmem>>, vector<1x8x128xf32>,
    return
  }
  func.func @transform_0(%arg0: i32) -> (i32, i32) {
    %c0_i32 = arith.constant 0 : i32
    %c0_i32_0 = arith.constant 0 : i32
    return %arg0, %c0_i32 : i32, i32
  }
  func.func @transform_1(%arg0: i32) -> (i32, i32) {
    %c0_i32 = arith.constant 0 : i32
    %c0_i32_0 = arith.constant 0 : i32
    return %arg0, %c0_i32 : i32, i32
  }
  func.func @transform_2(%arg0: i32) -> (i32, i32, i32) {
    %c0_i32 = arith.constant 0 : i32
    %c0_i32_0 = arith.constant 0 : i32
    %c0_i32_1 = arith.constant 0 : i32
    return %arg0, %c0_i32, %c0_i32_0 : i32, i32, i32
  }
}

</mosaic_0001>

<llo_original>
// kernel: tpu_custom_call.1
$region0: #{tpu_custom_call.1}
  #allocation0 [shape = 'u32[]', space=smem, size = 0x4, offset = 0x4, fixed_abs, tag = 'smem constant byte address 0x4 - core index']
  #allocation1 [shape = 'u32[144,128]{1,0:T(1,128)}', space=vmem, size = 0x12000, scoped, tag = 'internal scratch']
  %s0 = inlined_call_operand.vmem [shape: f32[8,32], index: 0, kind: input, shape index: {}]
  %s1 = inlined_call_operand.vmem [shape: s32[8,1], index: 1, kind: input, shape index: {}]
  %s2 = inlined_call_operand.hbm [shape: f32[1,8,128], index: 2, kind: output, shape index: {}]
  %s3 = sld [smem:[#allocation0]]
  $region18: #{tpu_custom_call.1} parent=0
    _
  %s5 = ssub.s32 1, %s3
  %s6 = scalar_select 0, %s5, %s3
  $region1: #{tpu_custom_call.1} parent=0
    #allocation2 [shape = 'u8[4096]{0}', space=vmem, size = 0x1000, scoped, tag = 'output window, operand 0, single buffered']
    #allocation3 [shape = 's32[1]{0}', space=sflag, size = 0x4, scoped, tag = 'scoped memory for tpu_custom_call.1']
    %7 = vsyncpa [#allocation3], 0
    // Predicated region
    $region2: #{tpu_custom_call.1} parent=1 // pred_check
      _
    $region3: #{tpu_custom_call.1} parent=1 // pred_check_branch
      %9 = sbr.rel (0) target = $region5
    $region4: #{tpu_custom_call.1} parent=1 // pred_region
      _
    $region5: #{tpu_custom_call.1} parent=1 // pred_fallthru
      _
    // Predicated region
    $region6: #{tpu_custom_call.1} parent=1 // pred_check
      _
    $region7: #{tpu_custom_call.1} parent=1 // pred_check_branch
      %11 = sbr.rel (0) target = $region9
    $region8: #{tpu_custom_call.1} parent=1 // pred_region
      _
    $region9: #{tpu_custom_call.1} parent=1 // pred_fallthru
      _
    %v12 = vld [vmem:[%s0] sm:$0xff]
    %v13 = vld [vmem:[%s1] sm:$0xff]
    %vm14 = vcmask 261120
    %v15 = vsel %vm14, %v12, -inf
    %16 = vmax.xlane.f32.xlu0 %v15
    %v17 = vpop.xlane.xlu0 %16
    %v18 = vsub.f32 %v12, %v17
    %v19 = vmul.f32 %v18, 1.442695
    %v20 = vpow.pop %v19
    %v21 = vsel %vm14, %v20, 0.0
    %22 = vadd.xlane.f32.xlu0 %v21
    %v23 = vpop.xlane.xlu0 %22
    %v24 = vlog2.pop %v23
    %v25 = vmul.f32 %v24, 0.6931472
    %v26 = vadd.f32 %v17, %v25
    %v27 = vsel %vm14, %v12, 0.0
    %28 = vadd.xlane.f32.xlu0 %v27
    %v29 = vpop.xlane.xlu0 %28
    %v30 = vlaneseq
    %v31 = vand.u32 %v30, 127
    %32 = vset.pattern.permute.xlu0 0
    %33 = vperm.xlu0 %32, %v13
    %v34 = vpop.permute.xlu0 %33
    %vm35 = vcmp.eq.s32.totalorder %v31, %v34
    %v36 = vsel %vm35, %v12, 0.0
    %v37 = vsel %vm14, %v36, 0.0
    %38 = vadd.xlane.f32.xlu0 %v37
    %v39 = vpop.xlane.xlu0 %38
    %v40 = vmul.f32 %v26, 32.0
    %v41 = vsub.f32 %v40, %v29
    %v42 = vsub.f32 %v26, %v39
    %vm43 = vcmask 7168
    %v44 = vsel %vm43, %v41, 0.0
    %45 = vadd.xlane.f32.xlu0 %v44
    %v46 = vpop.xlane.xlu0 %45
    %v47 = vrot.slane %v46, 4
    %v48 = vadd.f32 %v46, %v47
    %v49 = vrot.slane %v48, 2
    %v50 = vadd.f32 %v48, %v49
    %v51 = vrot.slane %v50, 1
    %v52 = vadd.f32 %v50, %v51
    %s53 = vtos %v52
    %v54 = vsel %vm43, %v42, 0.0
    %55 = vadd.xlane.f32.xlu0 %v54
    %v56 = vpop.xlane.xlu0 %55
    %v57 = vrot.slane %v56, 4
    %v58 = vadd.f32 %v56, %v57
    %v59 = vrot.slane %v58, 2
    %v60 = vadd.f32 %v58, %v59
    %v61 = vrot.slane %v60, 1
    %v62 = vadd.f32 %v60, %v61
    %s63 = vtos %v62
    %v64 = vlaneseq
    %v65 = vshrl.u32 %v64, 7
    %vm66 = vcmp.eq.s32.totalorder %v65, 0
    %vm67 = vcmp.eq.s32.totalorder %v65, 1
    %v68 = vstv %s63
    %v69 = vsel %vm67, %v68, 0.0
    %v70 = vstv %s53
    %v71 = vsel %vm66, %v70, %v69
    %72 = vst [vmem:[#allocation2] sm:$0xff] %v71
    // Predicated region
    $region10: #{tpu_custom_call.1} parent=1 // pred_check
      _
    $region11: #{tpu_custom_call.1} parent=1 // pred_check_branch
      %74 = sbr.rel (0) target = $region13
    $region12: #{tpu_custom_call.1} parent=1 // pred_region
      %s76 = ssub.s32 128, 128
      %77 = vsyncadd [#allocation3], %s76
      %s79 = sshll.u32 [#allocation2], 4
      %s80 = int_to_ptr.vmem [resolvable:$true] %s79
      %82 = dma.vmem_to_hbm [thread:$0]  %s80, 128, %s2, [#allocation3]
    $region13: #{tpu_custom_call.1} parent=1 // pred_fallthru
      _
    // Predicated region
    $region14: #{tpu_custom_call.1} parent=1 // pred_check
      _
    $region15: #{tpu_custom_call.1} parent=1 // pred_check_branch
      %84 = sbr.rel (0) target = $region17
    $region16: #{tpu_custom_call.1} parent=1 // pred_region
      %85 = dma.done [#allocation3], 128
    $region17: #{tpu_custom_call.1} parent=1 // pred_fallthru
      _
    %86 = vsyncpa [#allocation3], 1

</llo_original>
